<compile_context>
chip_gen: v7x
topology: tpu7x:2x2x1
jax: 0.10.0
libtpu: 0.0.40
codegen_flags: <defaults>
</compile_context>

<pallas_src>
import jax
import jax.numpy as jnp
from jax.experimental import pallas as pl
from jax.experimental.pallas import tpu as pltpu

VMEM_SPEC = pl.BlockSpec(memory_space=pltpu.MemorySpace.VMEM)


def _tree_sum(xs):
    """Pairwise tree-sum of a list of arrays (keeps ILP, no serial chain)."""
    xs = list(xs)
    while len(xs) > 1:
        nxt = [xs[i] + xs[i + 1] for i in range(0, len(xs) - 1, 2)]
        if len(xs) % 2:
            nxt.append(xs[-1])
        xs = nxt
    return xs[0]


# ------------------------------------------------------------- fused kernel --

def build_fused_critic(B, H, num_filters, feature_dim, stride):
    """Single fused pallas_call for the whole Critic forward."""
    F, FD = num_filters, feature_dim
    OH1 = (H - 3) // stride + 1        # conv1 spatial (7 for H=16, stride=2)
    OH2 = OH1 - 2                      # conv2 spatial, stride 1 (5)
    RW = (B - 1) * OH1 + OH2           # combined conv2/fc row slab

    def kernel(x1_ref, act_ref, w1_ref, cb_ref, w2r_ref, wfc_ref, ev_ref,
               w1f_ref, w1a_ref, w2q_ref, w3q_ref, qb_ref, q_ref):
        f32 = jnp.float32

        # ---- conv1 + ReLU: ONE MXU dot over the im2col slab ----------------
        # rows = (b, out_row), cols = (out_col, filter)
        h1 = jnp.dot(x1_ref[...], w1_ref[...], preferred_element_type=f32)
        h1 = jnp.maximum(h1 + cb_ref[0:1, :], 0.0)            # (B*OH1, OH1*F)

        # ---- conv2 + ReLU: 3 MXU dots (one per kernel row) -----------------
        # Banded block-diagonal weights fold the 3 column taps and the channel
        # contraction into one K = OH1*F contraction.  The row slab [i : i+RW]
        # covers every batch item at once; the OH1-OH2 rows between batch
        # items are cross-batch junk and are never read below.
        parts = [jnp.dot(h1[i:i + RW, :], w2r_ref[i],
                         preferred_element_type=f32) for i in range(3)]
        h2 = jnp.maximum(_tree_sum(parts) + cb_ref[1:2, 0:OH2 * F], 0.0)

        # ---- encoder fc (PyTorch NCHW flatten): ONE MXU dot ----------------
        # y[b*OH1 + r, r*FD + k] holds row r's contribution to fc[b, k]; the
        # flatten is just a sum of OH2 diagonal FD-wide blocks per batch item.
        y = jnp.dot(h2, wfc_ref[...], preferred_element_type=f32)   # (RW, OH2*FD)
        row_ids = jax.lax.broadcasted_iota(jnp.int32, (B, 1), 0)
        fc = None
        for b in range(B):
            blocks = [y[b * OH1 + r:b * OH1 + r + 1, r * FD:(r + 1) * FD]
                      for r in range(OH2)]
            fc_b = _tree_sum(blocks)                                 # (1, FD)
            fc = fc_b if fc is None else jnp.where(row_ids >= b, fc_b, fc)
        fc = fc + ev_ref[0:1, :]                                     # (B, FD)

        # ---- LayerNorm + tanh (encoder head) --------------------------------
        mu = jnp.mean(fc, axis=-1, keepdims=True)
        var = jnp.mean((fc - mu) ** 2, axis=-1, keepdims=True)
        fea = jnp.tanh((fc - mu) * jax.lax.rsqrt(var + 1e-5) * ev_ref[1:2, :]
                       + ev_ref[2:3, :])

        # ---- fused Q1/Q2 MLPs ------------------------------------------------
        # obs/action concat replaced by split layer-1 weights; layers 2/3 are
        # block-diagonal -> output column 0 = Q1, column 1 = Q2.
        h = jnp.dot(fea, w1f_ref[...], preferred_element_type=f32)
        h = h + jnp.dot(act_ref[...], w1a_ref[...], preferred_element_type=f32)
        h = jnp.maximum(h + qb_ref[0:1, :], 0.0)
        h = jnp.maximum(jnp.dot(h, w2q_ref[...], preferred_element_type=f32)
                        + qb_ref[1:2, :], 0.0)
        q_ref[...] = (jnp.dot(h, w3q_ref[...], preferred_element_type=f32)
                      + qb_ref[2:3, 0:2])                            # (B, 2)

    fused = pl.pallas_call(
        kernel,
        out_shape=jax.ShapeDtypeStruct((B, 2), jnp.float32),
        in_specs=[VMEM_SPEC] * 12,
        out_specs=VMEM_SPEC,
        # Note: grid-less (everything fits in a few vregs at B=2).  For large
        # B, add a batch grid axis + BlockSpecs and mark it "parallel" so
        # v7x's second TensorCore is used.
    )
    return fused, OH1, OH2


# ---------------------------------------------------- one-time param layout --

def prep_kernel_params(conv1_w, conv1_b, conv2_w, conv2_b,
                       enc_w, enc_b, ln_g, ln_b,
                       q1_params, q2_params,
                       C, num_filters, feature_dim, OH1, OH2):
    """Permute / pack all weights ONCE so the kernel needs no reshapes."""
    F, FD = num_filters, feature_dim
    f32 = jnp.float32

    # conv1: torch (O, C, 3, 3) -> im2col weight (9C, F) -> block-diagonal
    # over the OH1 output columns: (OH1*9C, OH1*F).
    w1_im = jnp.transpose(conv1_w, (2, 3, 1, 0)).reshape(9 * C, F)
    w1_big = jnp.einsum('ij,kl->ikjl', jnp.eye(OH1, dtype=f32), w1_im)
    w1_big = w1_big.reshape(OH1 * 9 * C, OH1 * F)

    # conv2: one banded block weight per kernel row i: (OH1*F, OH2*F) with
    # block (cc, c) = w2[:, :, i, cc-c] for 0 <= cc-c <= 2, else zero.
    w2_t = jnp.transpose(conv2_w, (2, 3, 1, 0))                  # (i, j, f, g)
    w2_rows = jnp.zeros((3, OH1, F, OH2, F), f32)
    for i in range(3):
        for j in range(3):
            for c in range(OH2):
                w2_rows = w2_rows.at[i, c + j, :, c, :].set(w2_t[i, j])
    w2_rows = w2_rows.reshape(3, OH1 * F, OH2 * F)

    # conv biases tiled over output columns, padded to a common lane width.
    conv_bias = jnp.stack([jnp.tile(conv1_b, OH1),
                           jnp.pad(jnp.tile(conv2_b, OH2), (0, (OH1 - OH2) * F))])

    # encoder fc: rows = (c, f), cols = (r, k)  -- PyTorch NCHW .view order.
    wfc = enc_w.reshape(F, OH2, OH2, FD).transpose(2, 0, 1, 3)
    wfc = wfc.reshape(OH2 * F, OH2 * FD)
    enc_vec = jnp.stack([enc_b, ln_g, ln_b])                     # (3, FD)

    # fused Q1/Q2 head.
    (a_w1, a_b1, a_w2, a_b2, a_w3, a_b3) = q1_params
    (b_w1, b_b1, b_w2, b_b2, b_w3, b_b3) = q2_params
    hd = a_w2.shape[0]
    w1f = jnp.concatenate([a_w1[:FD], b_w1[:FD]], axis=1)        # (FD, 2H)
    w1a = jnp.concatenate([a_w1[FD:], b_w1[FD:]], axis=1)        # (A,  2H)
    z = jnp.zeros((hd, hd), f32)
    w2q = jnp.block([[a_w2, z], [z, b_w2]])                      # (2H, 2H)
    z1 = jnp.zeros((hd, 1), f32)
    w3q = jnp.block([[a_w3, z1], [z1, b_w3]])                    # (2H, 2)
    q_bias = jnp.stack([jnp.concatenate([a_b1, b_b1]),
                        jnp.concatenate([a_b2, b_b2]),
                        jnp.pad(jnp.concatenate([a_b3, b_b3]), (0, 2 * hd - 2))])
    return (w1_big, conv_bias, w2_rows, wfc, enc_vec,
            w1f, w1a, w2q, w3q, q_bias)


# -------------------------------------------------------------------- main ---

if __name__ == "__main__":
    B = 2
    obs_shape = (4, 16, 16)            # (C, H, W)
    action_dim = 6                     # action_shape = (6,)
    hidden_dim = 32
    encoder_feature_dim = 32
    num_layers = 2
    num_filters = 8
    stride = 2
    fff_dim = encoder_feature_dim      # get_dim default branch

    C, H, W_ = obs_shape
    assert H == W_ and H % 2 == 0      # review: guard spatial parity for stride-2

    key = jax.random.PRNGKey(0)
    keys = iter(jax.random.split(key, 32))
    ortho = jax.nn.initializers.orthogonal()

    # encoder conv params (torch OIHW layout), zero biases
    conv1_w = 0.1 * jax.random.normal(next(keys), (num_filters, C, 3, 3), jnp.float32)
    conv1_b = jnp.zeros((num_filters,), jnp.float32)
    conv2_w = 0.1 * jax.random.normal(next(keys), (num_filters, num_filters, 3, 3), jnp.float32)
    conv2_b = jnp.zeros((num_filters,), jnp.float32)

    OH1 = (H - 3) // stride + 1
    OH2 = OH1 - 2
    conv_flat_dim = num_filters * OH2 * OH2

    # encoder fc + LayerNorm params (orthogonal weight, zero bias)
    enc_w = ortho(next(keys), (conv_flat_dim, encoder_feature_dim), jnp.float32)
    enc_b = jnp.zeros((encoder_feature_dim,), jnp.float32)
    ln_g = jnp.ones((encoder_feature_dim,), jnp.float32)
    ln_b = jnp.zeros((encoder_feature_dim,), jnp.float32)

    # Q1 / Q2 MLP params (orthogonal weights, zero biases)
    def make_q_params():
        w1 = ortho(next(keys), (fff_dim + action_dim, hidden_dim), jnp.float32)
        w2 = ortho(next(keys), (hidden_dim, hidden_dim), jnp.float32)
        w3 = ortho(next(keys), (hidden_dim, 1), jnp.float32)
        return (w1, jnp.zeros((hidden_dim,), jnp.float32),
                w2, jnp.zeros((hidden_dim,), jnp.float32),
                w3, jnp.zeros((1,), jnp.float32))

    q1_params = make_q_params()
    q2_params = make_q_params()

    obs = jax.random.uniform(next(keys), (B,) + obs_shape, jnp.float32)
    action = jax.random.normal(next(keys), (B, action_dim), jnp.float32)

    fused, OH1, OH2 = build_fused_critic(B, H, num_filters,
                                         encoder_feature_dim, stride)
    kparams = prep_kernel_params(conv1_w, conv1_b, conv2_w, conv2_b,
                                 enc_w, enc_b, ln_g, ln_b,
                                 q1_params, q2_params,
                                 C, num_filters, encoder_feature_dim, OH1, OH2)

    @jax.jit
    def critic_forward(obs, action):
        # conv1 im2col slab (~14 KB): pure XLA layout plumbing so conv1 is one
        # in-kernel MXU dot.  rows = (b, out_row), cols = (out_col, tap, chan).
        x = jnp.transpose(obs, (0, 2, 3, 1))                      # NHWC
        span = stride * (OH1 - 1) + 1
        taps = [x[:, ti:ti + span:stride, tj:tj + span:stride, :]
                for ti in range(3) for tj in range(3)]
        X1 = jnp.stack(taps, axis=3).reshape(B * OH1, OH1 * 9 * C)
        q = fused(X1, action, *kparams)
        return q[:, 0:1], q[:, 1:2]

    q1, q2 = critic_forward(obs, action)
    jax.block_until_ready((q1, q2))
    assert q1.shape == (B, 1) and q2.shape == (B, 1)
    assert q1.dtype == jnp.float32 and q2.dtype == jnp.float32

    # ---- pure-JAX reference (PyTorch semantics) correctness check ----------
    def reference(obs, action):
        dn = ('NCHW', 'OIHW', 'NCHW')
        hp = jax.lax.Precision.HIGHEST
        h = jax.lax.conv_general_dilated(obs, conv1_w, (stride, stride), 'VALID',
                                         dimension_numbers=dn, precision=hp)
        h = jnp.maximum(h + conv1_b.reshape(1, -1, 1, 1), 0.0)
        h = jax.lax.conv_general_dilated(h, conv2_w, (1, 1), 'VALID',
                                         dimension_numbers=dn, precision=hp)
        h = jnp.maximum(h + conv2_b.reshape(1, -1, 1, 1), 0.0)
        h = h.reshape(B, -1)                                       # NCHW flatten
        h = jnp.dot(h, enc_w, precision=hp) + enc_b
        mu = h.mean(-1, keepdims=True)
        var = ((h - mu) ** 2).mean(-1, keepdims=True)
        fea = jnp.tanh((h - mu) / jnp.sqrt(var + 1e-5) * ln_g + ln_b)
        oa = jnp.concatenate([fea, action], axis=1)

        def qf(p):
            w1, b1, w2, b2, w3, b3 = p
            t = jnp.maximum(jnp.dot(oa, w1, precision=hp) + b1, 0.0)
            t = jnp.maximum(jnp.dot(t, w2, precision=hp) + b2, 0.0)
            return jnp.dot(t, w3, precision=hp) + b3
        return qf(q1_params), qf(q2_params)

    r1, r2 = reference(obs, action)
    err = max(float(jnp.max(jnp.abs(q1 - r1))), float(jnp.max(jnp.abs(q2 - r2))))
    # In-kernel dots run at the MXU's default f32 precision while the
    # reference uses Precision.HIGHEST, hence the slightly loose tolerance.
    assert err < 1e-2, f"mismatch vs reference: {err}"

    print("KERNEL_OK")
</pallas_src>

<mosaic_0001>
module attributes {stable_mosaic.version = 11 : i64} {
  func.func @kernel(%arg0: memref<14x252xf32, #tpu.memory_space<vmem>>, %arg1: memref<2x6xf32, #tpu.memory_space<vmem>>, %arg2: memref<252x56xf32, #tpu.memory_space<vmem>>, %arg3: memref<2x56xf32, #tpu.memory_space<vmem>>, %arg4: memref<3x56x40xf32, #tpu.memory_space<vmem>>, %arg5: memref<40x160xf32, #tpu.memory_space<vmem>>, %arg6: memref<3x32xf32, #tpu.memory_space<vmem>>, %arg7: memref<32x64xf32, #tpu.memory_space<vmem>>, %arg8: memref<6x64xf32, #tpu.memory_space<vmem>>, %arg9: memref<64x64xf32, #tpu.memory_space<vmem>>, %arg10: memref<64x2xf32, #tpu.memory_space<vmem>>, %arg11: memref<3x64xf32, #tpu.memory_space<vmem>>, %arg12: memref<2x2xf32, #tpu.memory_space<vmem>>) attributes {dimension_semantics = [], scalar_prefetch = 0 : i64, scratch_operands = 0 : i64, tpu.core_type = #tpu.core_type<tc>} {
    %c0 = arith.constant 0 : index
    %c0_0 = arith.constant 0 : index
    %0 = vector.load %arg0[%c0, %c0_0] : memref<14x252xf32, #tpu.memory_space<vmem>>, vector<14x252xf32>
    %c0_1 = arith.constant 0 : index
    %c0_2 = arith.constant 0 : index
    %1 = vector.load %arg2[%c0_1, %c0_2] : memref<252x56xf32, #tpu.memory_space<vmem>>, vector<252x56xf32>
    %cst = arith.constant dense<0.000000e+00> : vector<14x56xf32>
    %2 = tpu.matmul %0, %1, %cst {dimension_numbers = #tpu.dot_dimension_numbers<[1], [0], [0], [1], [0, 0, 1, 1], [], []>} : vector<14x252xf32>, vector<252x56xf32>, vector<14x56xf32> -> vector<14x56xf32>
    %c0_3 = arith.constant 0 : index
    %c0_4 = arith.constant 0 : index
    %3 = vector.load %arg3[%c0_3, %c0_4] : memref<2x56xf32, #tpu.memory_space<vmem>>, vector<1x56xf32>
    %4 = vector.broadcast %3 : vector<1x56xf32> to vector<14x56xf32>
    %5 = arith.addf %2, %4 : vector<14x56xf32>
    %cst_5 = arith.constant 0.000000e+00 : f32
    %6 = vector.broadcast %cst_5 : f32 to vector<14x56xf32>
    %7 = arith.maximumf %5, %6 : vector<14x56xf32>
    %8 = vector.extract_strided_slice %7 {offsets = [0, 0], sizes = [12, 56], strides = [1, 1]} : vector<14x56xf32> to vector<12x56xf32>
    %c0_6 = arith.constant 0 : index
    %c0_7 = arith.constant 0 : index
    %c0_8 = arith.constant 0 : index
    %9 = vector.load %arg4[%c0_6, %c0_7, %c0_8] : memref<3x56x40xf32, #tpu.memory_space<vmem>>, vector<1x56x40xf32>
    %10 = vector.shape_cast %9 : vector<1x56x40xf32> to vector<56x40xf32>
    %cst_9 = arith.constant dense<0.000000e+00> : vector<12x40xf32>
    %11 = tpu.matmul %8, %10, %cst_9 {dimension_numbers = #tpu.dot_dimension_numbers<[1], [0], [0], [1], [0, 0, 1, 1], [], []>} : vector<12x56xf32>, vector<56x40xf32>, vector<12x40xf32> -> vector<12x40xf32>
    %12 = vector.extract_strided_slice %7 {offsets = [1, 0], sizes = [12, 56], strides = [1, 1]} : vector<14x56xf32> to vector<12x56xf32>
    %c1 = arith.constant 1 : index
    %c0_10 = arith.constant 0 : index
    %c0_11 = arith.constant 0 : index
    %13 = vector.load %arg4[%c1, %c0_10, %c0_11] : memref<3x56x40xf32, #tpu.memory_space<vmem>>, vector<1x56x40xf32>
    %14 = vector.shape_cast %13 : vector<1x56x40xf32> to vector<56x40xf32>
    %cst_12 = arith.constant dense<0.000000e+00> : vector<12x40xf32>
    %15 = tpu.matmul %12, %14, %cst_12 {dimension_numbers = #tpu.dot_dimension_numbers<[1], [0], [0], [1], [0, 0, 1, 1], [], []>} : vector<12x56xf32>, vector<56x40xf32>, vector<12x40xf32> -> vector<12x40xf32>
    %16 = vector.extract_strided_slice %7 {offsets = [2, 0], sizes = [12, 56], strides = [1, 1]} : vector<14x56xf32> to vector<12x56xf32>
    %c2 = arith.constant 2 : index
    %c0_13 = arith.constant 0 : index
    %c0_14 = arith.constant 0 : index
    %17 = vector.load %arg4[%c2, %c0_13, %c0_14] : memref<3x56x40xf32, #tpu.memory_space<vmem>>, vector<1x56x40xf32>
    %18 = vector.shape_cast %17 : vector<1x56x40xf32> to vector<56x40xf32>
    %cst_15 = arith.constant dense<0.000000e+00> : vector<12x40xf32>
    %19 = tpu.matmul %16, %18, %cst_15 {dimension_numbers = #tpu.dot_dimension_numbers<[1], [0], [0], [1], [0, 0, 1, 1], [], []>} : vector<12x56xf32>, vector<56x40xf32>, vector<12x40xf32> -> vector<12x40xf32>
    %20 = arith.addf %11, %15 : vector<12x40xf32>
    %21 = arith.addf %20, %19 : vector<12x40xf32>
    %c1_16 = arith.constant 1 : index
    %c0_17 = arith.constant 0 : index
    %22 = vector.load %arg3[%c1_16, %c0_17] : memref<2x56xf32, #tpu.memory_space<vmem>>, vector<1x40xf32>
    %23 = vector.broadcast %22 : vector<1x40xf32> to vector<12x40xf32>
    %24 = arith.addf %21, %23 : vector<12x40xf32>
    %cst_18 = arith.constant 0.000000e+00 : f32
    %25 = vector.broadcast %cst_18 : f32 to vector<12x40xf32>
    %26 = arith.maximumf %24, %25 : vector<12x40xf32>
    %c0_19 = arith.constant 0 : index
    %c0_20 = arith.constant 0 : index
    %27 = vector.load %arg5[%c0_19, %c0_20] : memref<40x160xf32, #tpu.memory_space<vmem>>, vector<40x160xf32>
    %cst_21 = arith.constant dense<0.000000e+00> : vector<12x160xf32>
    %28 = tpu.matmul %26, %27, %cst_21 {dimension_numbers = #tpu.dot_dimension_numbers<[1], [0], [0], [1], [0, 0, 1, 1], [], []>} : vector<12x40xf32>, vector<40x160xf32>, vector<12x160xf32> -> vector<12x160xf32>
    %29 = tpu.iota {dimensions = array<i32: 0>} : vector<2x1xi32>
    %30 = vector.extract_strided_slice %28 {offsets = [0, 0], sizes = [1, 32], strides = [1, 1]} : vector<12x160xf32> to vector<1x32xf32>
    %31 = vector.extract_strided_slice %28 {offsets = [1, 32], sizes = [1, 32], strides = [1, 1]} : vector<12x160xf32> to vector<1x32xf32>
    %32 = vector.extract_strided_slice %28 {offsets = [2, 64], sizes = [1, 32], strides = [1, 1]} : vector<12x160xf32> to vector<1x32xf32>
    %33 = vector.extract_strided_slice %28 {offsets = [3, 96], sizes = [1, 32], strides = [1, 1]} : vector<12x160xf32> to vector<1x32xf32>
    %34 = vector.extract_strided_slice %28 {offsets = [4, 128], sizes = [1, 32], strides = [1, 1]} : vector<12x160xf32> to vector<1x32xf32>
    %35 = arith.addf %30, %31 : vector<1x32xf32>
    %36 = arith.addf %32, %33 : vector<1x32xf32>
    %37 = arith.addf %35, %36 : vector<1x32xf32>
    %38 = arith.addf %37, %34 : vector<1x32xf32>
    %39 = vector.extract_strided_slice %28 {offsets = [7, 0], sizes = [1, 32], strides = [1, 1]} : vector<12x160xf32> to vector<1x32xf32>
    %40 = vector.extract_strided_slice %28 {offsets = [8, 32], sizes = [1, 32], strides = [1, 1]} : vector<12x160xf32> to vector<1x32xf32>
    %41 = vector.extract_strided_slice %28 {offsets = [9, 64], sizes = [1, 32], strides = [1, 1]} : vector<12x160xf32> to vector<1x32xf32>
    %42 = vector.extract_strided_slice %28 {offsets = [10, 96], sizes = [1, 32], strides = [1, 1]} : vector<12x160xf32> to vector<1x32xf32>
    %43 = vector.extract_strided_slice %28 {offsets = [11, 128], sizes = [1, 32], strides = [1, 1]} : vector<12x160xf32> to vector<1x32xf32>
    %44 = arith.addf %39, %40 : vector<1x32xf32>
    %45 = arith.addf %41, %42 : vector<1x32xf32>
    %46 = arith.addf %44, %45 : vector<1x32xf32>
    %47 = arith.addf %46, %43 : vector<1x32xf32>
    %c1_i32 = arith.constant 1 : i32
    %48 = vector.broadcast %c1_i32 : i32 to vector<2x1xi32>
    %49 = arith.cmpi sge, %29, %48 : vector<2x1xi32>
    %50 = vector.shape_cast %49 : vector<2x1xi1> to vector<2x1xi1>
    %51 = vector.broadcast %50 : vector<2x1xi1> to vector<2x32xi1>
    %52 = vector.shape_cast %47 : vector<1x32xf32> to vector<1x32xf32>
    %53 = vector.broadcast %52 : vector<1x32xf32> to vector<2x32xf32>
    %54 = vector.shape_cast %38 : vector<1x32xf32> to vector<1x32xf32>
    %55 = vector.broadcast %54 : vector<1x32xf32> to vector<2x32xf32>
    %56 = arith.select %51, %53, %55 : vector<2x32xi1>, vector<2x32xf32>
    %c0_22 = arith.constant 0 : index
    %c0_23 = arith.constant 0 : index
    %57 = vector.load %arg6[%c0_22, %c0_23] : memref<3x32xf32, #tpu.memory_space<vmem>>, vector<1x32xf32>
    %58 = vector.broadcast %57 : vector<1x32xf32> to vector<2x32xf32>
    %59 = arith.addf %56, %58 : vector<2x32xf32>
    %cst_24 = arith.constant dense<0.000000e+00> : vector<2xf32>
    %60 = vector.multi_reduction <add>, %59, %cst_24 [1] : vector<2x32xf32> to vector<2xf32>
    %61 = vector.shape_cast %60 : vector<2xf32> to vector<2x1xf32>
    %cst_25 = arith.constant 3.200000e+01 : f32
    %62 = vector.broadcast %cst_25 : f32 to vector<2x1xf32>
    %63 = arith.divf %61, %62 : vector<2x1xf32>
    %64 = vector.broadcast %63 : vector<2x1xf32> to vector<2x32xf32>
    %65 = arith.subf %59, %64 : vector<2x32xf32>
    %66 = arith.mulf %65, %65 : vector<2x32xf32>
    %cst_26 = arith.constant dense<0.000000e+00> : vector<2xf32>
    %67 = vector.multi_reduction <add>, %66, %cst_26 [1] : vector<2x32xf32> to vector<2xf32>
    %68 = vector.shape_cast %67 : vector<2xf32> to vector<2x1xf32>
    %cst_27 = arith.constant 3.200000e+01 : f32
    %69 = vector.broadcast %cst_27 : f32 to vector<2x1xf32>
    %70 = arith.divf %68, %69 : vector<2x1xf32>
    %71 = vector.broadcast %63 : vector<2x1xf32> to vector<2x32xf32>
    %72 = arith.subf %59, %71 : vector<2x32xf32>
    %cst_28 = arith.constant 9.99999974E-6 : f32
    %73 = vector.broadcast %cst_28 : f32 to vector<2x1xf32>
    %74 = arith.addf %70, %73 : vector<2x1xf32>
    %75 = math.rsqrt %74 : vector<2x1xf32>
    %76 = vector.broadcast %75 : vector<2x1xf32> to vector<2x32xf32>
    %77 = arith.mulf %72, %76 : vector<2x32xf32>
    %c1_29 = arith.constant 1 : index
    %c0_30 = arith.constant 0 : index
    %78 = vector.load %arg6[%c1_29, %c0_30] : memref<3x32xf32, #tpu.memory_space<vmem>>, vector<1x32xf32>
    %79 = vector.broadcast %78 : vector<1x32xf32> to vector<2x32xf32>
    %80 = arith.mulf %77, %79 : vector<2x32xf32>
    %c2_31 = arith.constant 2 : index
    %c0_32 = arith.constant 0 : index
    %81 = vector.load %arg6[%c2_31, %c0_32] : memref<3x32xf32, #tpu.memory_space<vmem>>, vector<1x32xf32>
    %82 = vector.broadcast %81 : vector<1x32xf32> to vector<2x32xf32>
    %83 = arith.addf %80, %82 : vector<2x32xf32>
    %84 = math.tanh %83 : vector<2x32xf32>
    %c0_33 = arith.constant 0 : index
    %c0_34 = arith.constant 0 : index
    %85 = vector.load %arg7[%c0_33, %c0_34] : memref<32x64xf32, #tpu.memory_space<vmem>>, vector<32x64xf32>
    %cst_35 = arith.constant dense<0.000000e+00> : vector<2x64xf32>
    %86 = tpu.matmul %84, %85, %cst_35 {dimension_numbers = #tpu.dot_dimension_numbers<[1], [0], [0], [1], [0, 0, 1, 1], [], []>} : vector<2x32xf32>, vector<32x64xf32>, vector<2x64xf32> -> vector<2x64xf32>
    %c0_36 = arith.constant 0 : index
    %c0_37 = arith.constant 0 : index
    %87 = vector.load %arg1[%c0_36, %c0_37] : memref<2x6xf32, #tpu.memory_space<vmem>>, vector<2x6xf32>
    %c0_38 = arith.constant 0 : index
    %c0_39 = arith.constant 0 : index
    %88 = vector.load %arg8[%c0_38, %c0_39] : memref<6x64xf32, #tpu.memory_space<vmem>>, vector<6x64xf32>
    %cst_40 = arith.constant dense<0.000000e+00> : vector<2x64xf32>
    %89 = tpu.matmul %87, %88, %cst_40 {dimension_numbers = #tpu.dot_dimension_numbers<[1], [0], [0], [1], [0, 0, 1, 1], [], []>} : vector<2x6xf32>, vector<6x64xf32>, vector<2x64xf32> -> vector<2x64xf32>
    %90 = arith.addf %86, %89 : vector<2x64xf32>
    %c0_41 = arith.constant 0 : index
    %c0_42 = arith.constant 0 : index
    %91 = vector.load %arg11[%c0_41, %c0_42] : memref<3x64xf32, #tpu.memory_space<vmem>>, vector<1x64xf32>
    %92 = vector.broadcast %91 : vector<1x64xf32> to vector<2x64xf32>
    %93 = arith.addf %90, %92 : vector<2x64xf32>
    %cst_43 = arith.constant 0.000000e+00 : f32
    %94 = vector.broadcast %cst_43 : f32 to vector<2x64xf32>
    %95 = arith.maximumf %93, %94 : vector<2x64xf32>
    %c0_44 = arith.constant 0 : index
    %c0_45 = arith.constant 0 : index
    %96 = vector.load %arg9[%c0_44, %c0_45] : memref<64x64xf32, #tpu.memory_space<vmem>>, vector<64x64xf32>
    %cst_46 = arith.constant dense<0.000000e+00> : vector<2x64xf32>
    %97 = tpu.matmul %95, %96, %cst_46 {dimension_numbers = #tpu.dot_dimension_numbers<[1], [0], [0], [1], [0, 0, 1, 1], [], []>} : vector<2x64xf32>, vector<64x64xf32>, vector<2x64xf32> -> vector<2x64xf32>
    %c1_47 = arith.constant 1 : index
    %c0_48 = arith.constant 0 : index
    %98 = vector.load %arg11[%c1_47, %c0_48] : memref<3x64xf32, #tpu.memory_space<vmem>>, vector<1x64xf32>
    %99 = vector.broadcast %98 : vector<1x64xf32> to vector<2x64xf32>
    %100 = arith.addf %97, %99 : vector<2x64xf32>
    %cst_49 = arith.constant 0.000000e+00 : f32
    %101 = vector.broadcast %cst_49 : f32 to vector<2x64xf32>
    %102 = arith.maximumf %100, %101 : vector<2x64xf32>
    %c0_50 = arith.constant 0 : index
    %c0_51 = arith.constant 0 : index
    %103 = vector.load %arg10[%c0_50, %c0_51] : memref<64x2xf32, #tpu.memory_space<vmem>>, vector<64x2xf32>
    %cst_52 = arith.constant dense<0.000000e+00> : vector<2x2xf32>
    %104 = tpu.matmul %102, %103, %cst_52 {dimension_numbers = #tpu.dot_dimension_numbers<[1], [0], [0], [1], [0, 0, 1, 1], [], []>} : vector<2x64xf32>, vector<64x2xf32>, vector<2x2xf32> -> vector<2x2xf32>
    %c2_53 = arith.constant 2 : index
    %c0_54 = arith.constant 0 : index
    %105 = vector.load %arg11[%c2_53, %c0_54] : memref<3x64xf32, #tpu.memory_space<vmem>>, vector<1x2xf32>
    %106 = vector.broadcast %105 : vector<1x2xf32> to vector<2x2xf32>
    %107 = arith.addf %104, %106 : vector<2x2xf32>
    %c0_55 = arith.constant 0 : index
    %c0_56 = arith.constant 0 : index
    %108 = vector.load %arg12[%c0_55, %c0_56] : memref<2x2xf32, #tpu.memory_space<vmem>>, vector<2x2xf32>
    tpu.vector_store %arg12[%c0_55, %c0_56], %107 {strides = array<i32>} : memref<2x2xf32, #tpu.memory_space<vmem>>, vector<2x2xf32>,
    return
  }
}

</mosaic_0001>

<llo_original>
// kernel: critic_forward.1
$region0: #{critic_forward.1}
  #allocation0 [shape = 'u32[]', space=smem, size = 0x4, offset = 0x4, fixed_abs, tag = 'smem constant byte address 0x4 - core index']
  #allocation1 [shape = 'u32[144,128]{1,0:T(1,128)}', space=vmem, size = 0x12000, scoped, tag = 'internal scratch']
  %s0 = inlined_call_operand.vmem [shape: f32[14,252], index: 0, kind: input, shape index: {}]
  %s1 = inlined_call_operand.vmem [shape: f32[2,6], index: 1, kind: input, shape index: {}]
  %s2 = inlined_call_operand.vmem [shape: f32[252,56], index: 2, kind: input, shape index: {}]
  %s3 = inlined_call_operand.vmem [shape: f32[2,56], index: 3, kind: input, shape index: {}]
  %s4 = inlined_call_operand.vmem [shape: f32[3,56,40], index: 4, kind: input, shape index: {}]
  %s5 = inlined_call_operand.vmem [shape: f32[40,160], index: 5, kind: input, shape index: {}]
  %s6 = inlined_call_operand.vmem [shape: f32[3,32], index: 6, kind: input, shape index: {}]
  %s7 = inlined_call_operand.vmem [shape: f32[32,64], index: 7, kind: input, shape index: {}]
  %s8 = inlined_call_operand.vmem [shape: f32[6,64], index: 8, kind: input, shape index: {}]
  %s9 = inlined_call_operand.vmem [shape: f32[64,64], index: 9, kind: input, shape index: {}]
  %s10 = inlined_call_operand.vmem [shape: f32[64,2], index: 10, kind: input, shape index: {}]
  %s11 = inlined_call_operand.vmem [shape: f32[3,64], index: 11, kind: input, shape index: {}]
  %s12 = inlined_call_operand.vmem [shape: f32[2,2], index: 12, kind: output, shape index: {}]
  %s13 = sld [smem:[#allocation0]]
  $region58: #{critic_forward.1} parent=0
    _
  %s15 = ssub.s32 1, %s13
  %s16 = scalar_select 0, %s15, %s13
  // Predicated region
  $region2: #{critic_forward.1} parent=0 // pred_check
    _
  $region3: #{critic_forward.1} parent=0 // pred_check_branch
    %18 = sbr.rel (0) target = $region5
  $region4: #{critic_forward.1} parent=0 // pred_region
    _
  $region5: #{critic_forward.1} parent=0 // pred_fallthru
    _
  // Predicated region
  $region6: #{critic_forward.1} parent=0 // pred_check
    _
  $region7: #{critic_forward.1} parent=0 // pred_check_branch
    %20 = sbr.rel (0) target = $region9
  $region8: #{critic_forward.1} parent=0 // pred_region
    _
  $region9: #{critic_forward.1} parent=0 // pred_fallthru
    _
  // Predicated region
  $region10: #{critic_forward.1} parent=0 // pred_check
    _
  $region11: #{critic_forward.1} parent=0 // pred_check_branch
    %22 = sbr.rel (0) target = $region13
  $region12: #{critic_forward.1} parent=0 // pred_region
    _
  $region13: #{critic_forward.1} parent=0 // pred_fallthru
    _
  // Predicated region
  $region14: #{critic_forward.1} parent=0 // pred_check
    _
  $region15: #{critic_forward.1} parent=0 // pred_check_branch
    %24 = sbr.rel (0) target = $region17
  $region16: #{critic_forward.1} parent=0 // pred_region
    _
  $region17: #{critic_forward.1} parent=0 // pred_fallthru
    _
  // Predicated region
  $region18: #{critic_forward.1} parent=0 // pred_check
    _
  $region19: #{critic_forward.1} parent=0 // pred_check_branch
    %26 = sbr.rel (0) target = $region21
  $region20: #{critic_forward.1} parent=0 // pred_region
    _
  $region21: #{critic_forward.1} parent=0 // pred_fallthru
    _
  // Predicated region
  $region22: #{critic_forward.1} parent=0 // pred_check
    _
  $region23: #{critic_forward.1} parent=0 // pred_check_branch
    %28 = sbr.rel (0) target = $region25
  $region24: #{critic_forward.1} parent=0 // pred_region
    _
  $region25: #{critic_forward.1} parent=0 // pred_fallthru
    _
  // Predicated region
  $region26: #{critic_forward.1} parent=0 // pred_check
    _
  $region27: #{critic_forward.1} parent=0 // pred_check_branch
    %30 = sbr.rel (0) target = $region29
  $region28: #{critic_forward.1} parent=0 // pred_region
    _
  $region29: #{critic_forward.1} parent=0 // pred_fallthru
    _
  // Predicated region
  $region30: #{critic_forward.1} parent=0 // pred_check
    _
  $region31: #{critic_forward.1} parent=0 // pred_check_branch
    %32 = sbr.rel (0) target = $region33
  $region32: #{critic_forward.1} parent=0 // pred_region
    _
  $region33: #{critic_forward.1} parent=0 // pred_fallthru
    _
  // Predicated region
  $region34: #{critic_forward.1} parent=0 // pred_check
    _
  $region35: #{critic_forward.1} parent=0 // pred_check_branch
    %34 = sbr.rel (0) target = $region37
  $region36: #{critic_forward.1} parent=0 // pred_region
    _
  $region37: #{critic_forward.1} parent=0 // pred_fallthru
    _
  // Predicated region
  $region38: #{critic_forward.1} parent=0 // pred_check
    _
  $region39: #{critic_forward.1} parent=0 // pred_check_branch
    %36 = sbr.rel (0) target = $region41
  $region40: #{critic_forward.1} parent=0 // pred_region
    _
  $region41: #{critic_forward.1} parent=0 // pred_fallthru
    _
  // Predicated region
  $region42: #{critic_forward.1} parent=0 // pred_check
    _
  $region43: #{critic_forward.1} parent=0 // pred_check_branch
    %38 = sbr.rel (0) target = $region45
  $region44: #{critic_forward.1} parent=0 // pred_region
    _
  $region45: #{critic_forward.1} parent=0 // pred_fallthru
    _
  // Predicated region
  $region46: #{critic_forward.1} parent=0 // pred_check
    _
  $region47: #{critic_forward.1} parent=0 // pred_check_branch
    %40 = sbr.rel (0) target = $region49
  $region48: #{critic_forward.1} parent=0 // pred_region
    _
  $region49: #{critic_forward.1} parent=0 // pred_fallthru
    _
  %v41 = vld [vmem:[%s0] sm:$0xff]
  %v42 = vld [vmem:[%s0 + $0x8] sm:$0xff]
  %v43 = vld [vmem:[%s0 + $0x10] sm:$0x3f]
  %v44 = vld [vmem:[%s0 + $0x18] sm:$0x3f]
  %v45 = vld [vmem:[%s2] sm:$0xff]
  %v46 = vld [vmem:[%s2 + $0x8] sm:$0xff]
  %v47 = vld [vmem:[%s2 + $0x10] sm:$0xff]
  %v48 = vld [vmem:[%s2 + $0x18] sm:$0xff]
  %v49 = vld [vmem:[%s2 + $0x20] sm:$0xff]
  %v50 = vld [vmem:[%s2 + $0x28] sm:$0xff]
  %v51 = vld [vmem:[%s2 + $0x30] sm:$0xff]
  %v52 = vld [vmem:[%s2 + $0x38] sm:$0xff]
  %v53 = vld [vmem:[%s2 + $0x40] sm:$0xff]
  %v54 = vld [vmem:[%s2 + $0x48] sm:$0xff]
  %v55 = vld [vmem:[%s2 + $0x50] sm:$0xff]
  %v56 = vld [vmem:[%s2 + $0x58] sm:$0xff]
  %v57 = vld [vmem:[%s2 + $0x60] sm:$0xff]
  %v58 = vld [vmem:[%s2 + $0x68] sm:$0xff]
  %v59 = vld [vmem:[%s2 + $0x70] sm:$0xff]
  %v60 = vld [vmem:[%s2 + $0x78] sm:$0xff]
  %v61 = vld [vmem:[%s2 + $0x80] sm:$0xff]
  %v62 = vld [vmem:[%s2 + $0x88] sm:$0xff]
  %v63 = vld [vmem:[%s2 + $0x90] sm:$0xff]
  %v64 = vld [vmem:[%s2 + $0x98] sm:$0xff]
  %v65 = vld [vmem:[%s2 + $0xa0] sm:$0xff]
  %v66 = vld [vmem:[%s2 + $0xa8] sm:$0xff]
  %v67 = vld [vmem:[%s2 + $0xb0] sm:$0xff]
  %v68 = vld [vmem:[%s2 + $0xb8] sm:$0xff]
  %v69 = vld [vmem:[%s2 + $0xc0] sm:$0xff]
  %v70 = vld [vmem:[%s2 + $0xc8] sm:$0xff]
  %v71 = vld [vmem:[%s2 + $0xd0] sm:$0xff]
  %v72 = vld [vmem:[%s2 + $0xd8] sm:$0xff]
  %v73 = vld [vmem:[%s2 + $0xe0] sm:$0xff]
  %v74 = vld [vmem:[%s2 + $0xe8] sm:$0xff]
  %v75 = vld [vmem:[%s2 + $0xf0] sm:$0xff]
  %v76 = vld [vmem:[%s2 + $0xf8] sm:$0xf]
  %v77 = vld [vmem:[%s3] sm:$0x1]
  %v78 = vlaneseq
  %v79 = vshrl.u32 %v78, 7
  %v80 = vsub.s32 0, %v79
  %v81 = vrot.slane %v77, %v80
  %vm82 = vcmask 1014784
  %v84 = vsel %vm82, %v42, 0
  %v87 = vsel %vm82, %v44, 0
  %vm89 = vcmask 1043456
  %v91 = vsel %vm89, %v76, 0
  %93 = vmatprep.subr.mxu0 0.0
  %94 = vmatpush1.msra.mxu0 %v45
  %95 = vmatprep.subr.mxu0 0.0
  %96 = vmatpush1.msra.mxu0 %v46
  %97 = vmatprep.subr.mxu0 0.0
  %98 = vmatpush1.msra.mxu0 %v47
  %99 = vmatprep.subr.mxu0 0.0
  %100 = vmatpush1.msra.mxu0 %v48
  %101 = vmatprep.subr.mxu0 0.0
  %102 = vmatpush1.msra.mxu0 %v49
  %103 = vmatprep.subr.mxu0 0.0
  %104 = vmatpush1.msra.mxu0 %v50
  %105 = vmatprep.subr.mxu0 0.0
  %106 = vmatpush1.msra.mxu0 %v51
  %107 = vmatprep.subr.mxu0 0.0
  %108 = vmatpush1.msra.mxu0 %v52
  %109 = vmatprep.subr.mxu0 0.0
  %110 = vmatpush1.msra.mxu0 %v53
  %111 = vmatprep.subr.mxu0 0.0
  %112 = vmatpush1.msra.mxu0 %v54
  %113 = vmatprep.subr.mxu0 0.0
  %114 = vmatpush1.msra.mxu0 %v55
  %115 = vmatprep.subr.mxu0 0.0
  %116 = vmatpush1.msra.mxu0 %v56
  %117 = vmatprep.subr.mxu0 0.0
  %118 = vmatpush1.msra.mxu0 %v57
  %119 = vmatprep.subr.mxu0 0.0
  %120 = vmatpush1.msra.mxu0 %v58
  %121 = vmatprep.subr.mxu0 0.0
  %122 = vmatpush1.msra.mxu0 %v59
  %123 = vmatprep.subr.mxu0 0.0
  %124 = vmatpush1.msra.mxu0 %v60
  %125 = vmatprep.subr.mxu0 0.0
  %126 = vmatpush1.msra.mxu0 %v61
  %127 = vmatprep.subr.mxu0 0.0
  %128 = vmatpush1.msra.mxu0 %v62
  %129 = vmatprep.subr.mxu0 0.0
  %130 = vmatpush1.msra.mxu0 %v63
  %131 = vmatprep.subr.mxu0 0.0
  %132 = vmatpush1.msra.mxu0 %v64
  %133 = vmatprep.subr.mxu0 0.0
  %134 = vmatpush1.msra.mxu0 %v65
  %135 = vmatprep.subr.mxu0 0.0
  %136 = vmatpush1.msra.mxu0 %v66
  %137 = vmatprep.subr.mxu0 0.0
  %138 = vmatpush1.msra.mxu0 %v67
  %139 = vmatprep.subr.mxu0 0.0
  %140 = vmatpush1.msra.mxu0 %v68
  %141 = vmatprep.subr.mxu0 0.0
  %142 = vmatpush1.msra.mxu0 %v69
  %143 = vmatprep.subr.mxu0 0.0
  %144 = vmatpush1.msra.mxu0 %v70
  %145 = vmatprep.subr.mxu0 0.0
  %146 = vmatpush1.msra.mxu0 %v71
  %147 = vmatprep.subr.mxu0 0.0
  %148 = vmatpush1.msra.mxu0 %v72
  %149 = vmatprep.subr.mxu0 0.0
  %150 = vmatpush1.msra.mxu0 %v73
  %151 = vmatprep.subr.mxu0 0.0
  %152 = vmatpush1.msra.mxu0 %v74
  %153 = vmatprep.subr.mxu0 0.0
  %154 = vmatpush1.msra.mxu0 %v75
  %155 = vmatprep.subr.mxu0 0.0
  %156 = vmatpush1.msra.mxu0 %v91
  %157 = vmatprep.mubr.f32.mxu0 %v84
  %158 = vmatmul.mubr.f32.gmra.mrb[0].mxu0 %v41
  %v159 = vpop.f32.mrb[0].mxu0
  %v160 = vadd.f32 %v81, %v159
  %v161 = vpop.f32.mrb[0].mxu0
  %162 = vmatprep.mubr.f32.mxu0 %v87
  %163 = vmatmul.mubr.f32.gmra.mrb[0].mxu0 %v43
  %v164 = vpop.f32.mrb[0].mxu0
  %v165 = vadd.f32 %v81, %v164
  %v166 = vpop.f32.mrb[0].mxu0
  %167 = vdwg.mxu0
  %v168 = vmax.f32 %v160, 0.0
  %v169 = vmax.f32 %v165, 0.0
  %v170 = vld [vmem:[%s4] sm:$0xff]
  %v171 = vld [vmem:[%s4 + $0x8] sm:$0xff]
  %v172 = vld [vmem:[%s4 + $0x10] sm:$0xff]
  %v173 = vld [vmem:[%s4 + $0x18] sm:$0xff]
  %v174 = vld [vmem:[%s4 + $0x20] sm:$0xff]
  %v175 = vld [vmem:[%s4 + $0x28] sm:$0xff]
  %v176 = vld [vmem:[%s4 + $0x30] sm:$0xff]
  %s177 = scalar_lea.vmem %s4, 56
  %v178 = vld [vmem:[%s177] sm:$0xff]
  %v179 = vld [vmem:[%s177 + $0x8] sm:$0xff]
  %v180 = vld [vmem:[%s177 + $0x10] sm:$0xff]
  %v181 = vld [vmem:[%s177 + $0x18] sm:$0xff]
  %v182 = vld [vmem:[%s177 + $0x20] sm:$0xff]
  %v183 = vld [vmem:[%s177 + $0x28] sm:$0xff]
  %v184 = vld [vmem:[%s177 + $0x30] sm:$0xff]
  %vm187 = vcmask 1046528
  %v188 = vrot.slane %v168, 1
  %v189 = vrot.slane %v169, 1
  %v190 = vsel %vm187, %v188, %v189
  %vm191 = vcmask 457728
  %v192 = vsel %vm191, %v190, 0
  %v194 = vsel %vm191, %v189, 0
  %196 = vmatprep.subr.mxu0 0.0
  %197 = vmatpush1.msra.mxu0 %v178
  %198 = vmatprep.subr.mxu0 0.0
  %199 = vmatpush1.msra.mxu0 %v179
  %200 = vmatprep.subr.mxu0 0.0
  %201 = vmatpush1.msra.mxu0 %v180
  %202 = vmatprep.subr.mxu0 0.0
  %203 = vmatpush1.msra.mxu0 %v181
  %204 = vmatprep.subr.mxu0 0.0
  %205 = vmatpush1.msra.mxu0 %v182
  %206 = vmatprep.subr.mxu0 0.0
  %207 = vmatpush1.msra.mxu0 %v183
  %208 = vmatprep.subr.mxu0 0.0
  %209 = vmatpush1.msra.mxu0 %v184
  %210 = vmatprep.subr.mxu0 0.0
  %211 = vmatpush1.msra.mxu0 0.0
  %212 = vmatprep.subr.mxu0 0.0
  %213 = vmatpush1.msra.mxu0 0.0
  %214 = vmatprep.subr.mxu0 0.0
  %215 = vmatpush1.msra.mxu0 0.0
  %216 = vmatprep.subr.mxu0 0.0
  %217 = vmatpush1.msra.mxu0 0.0
  %218 = vmatprep.subr.mxu0 0.0
  %219 = vmatpush1.msra.mxu0 0.0
  %220 = vmatprep.subr.mxu0 0.0
  %221 = vmatpush1.msra.mxu0 0.0
  %222 = vmatprep.subr.mxu0 0.0
  %223 = vmatpush1.msra.mxu0 0.0
  %224 = vmatprep.subr.mxu0 0.0
  %225 = vmatpush1.msra.mxu0 0.0
  %226 = vmatprep.subr.mxu0 0.0
  %227 = vmatpush1.msra.mxu0 0.0
  %228 = vmatprep.subr.mxu0 0.0
  %229 = vmatpush1.msra.mxu0 0.0
  %230 = vmatprep.subr.mxu0 0.0
  %231 = vmatpush1.msra.mxu0 0.0
  %232 = vmatprep.subr.mxu0 0.0
  %233 = vmatpush1.msra.mxu0 0.0
  %234 = vmatprep.subr.mxu0 0.0
  %235 = vmatpush1.msra.mxu0 0.0
  %236 = vmatprep.subr.mxu0 0.0
  %237 = vmatpush1.msra.mxu0 0.0
  %238 = vmatprep.subr.mxu0 0.0
  %239 = vmatpush1.msra.mxu0 0.0
  %240 = vmatprep.subr.mxu0 0.0
  %241 = vmatpush1.msra.mxu0 0.0
  %242 = vmatprep.subr.mxu0 0.0
  %243 = vmatpush1.msra.mxu0 0.0
  %244 = vmatprep.subr.mxu0 0.0
  %245 = vmatpush1.msra.mxu0 0.0
  %246 = vmatprep.subr.mxu0 0.0
  %247 = vmatpush1.msra.mxu0 0.0
  %248 = vmatprep.subr.mxu0 0.0
  %249 = vmatpush1.msra.mxu0 0.0
  %250 = vmatprep.subr.mxu0 0.0
  %251 = vmatpush1.msra.mxu0 0.0
  %252 = vmatprep.subr.mxu0 0.0
  %253 = vmatpush1.msra.mxu0 0.0
  %254 = vmatprep.subr.mxu0 0.0
  %255 = vmatpush1.msra.mxu0 0.0
  %256 = vmatprep.subr.mxu0 0.0
  %257 = vmatpush1.msra.mxu0 0.0
  %258 = vmatprep.subr.mxu0 0.0
  %259 = vmatpush1.msra.mxu0 0.0
  %260 = vmatprep.mubr.f32.mxu0 0.0
  %261 = vmatmul.mubr.f32.gmra.mrb[0].mxu0 %v192
  %v262 = vpop.f32.mrb[0].mxu0
  %v263 = vadd.f32 0.0, %v262
  %v264 = vpop.f32.mrb[0].mxu0
  %265 = vmatprep.mubr.f32.mxu0 0.0
  %266 = vmatmul.mubr.f32.gmra.mrb[0].mxu0 %v194
  %v267 = vpop.f32.mrb[0].mxu0
  %v268 = vadd.f32 0.0, %v267
  %v269 = vpop.f32.mrb[0].mxu0
  %270 = vdwg.mxu0
  %s271 = scalar_lea.vmem %s4, 112
  %v272 = vld [vmem:[%s271] sm:$0xff]
  %v273 = vld [vmem:[%s271 + $0x8] sm:$0xff]
  %v274 = vld [vmem:[%s271 + $0x10] sm:$0xff]
  %v275 = vld [vmem:[%s271 + $0x18] sm:$0xff]
  %v276 = vld [vmem:[%s271 + $0x20] sm:$0xff]
  %v277 = vld [vmem:[%s271 + $0x28] sm:$0xff]
  %v278 = vld [vmem:[%s271 + $0x30] sm:$0xff]
  %vm279 = vcmask 1045504
  %v280 = vrot.slane %v168, 2
  %v281 = vrot.slane %v169, 2
  %v282 = vsel %vm279, %v280, %v281
  %v283 = vsel %vm191, %v282, 0
  %v285 = vsel %vm191, %v281, 0
  %287 = vmatprep.subr.mxu0 0.0
  %288 = vmatpush1.msra.mxu0 %v272
  %289 = vmatprep.subr.mxu0 0.0
  %290 = vmatpush1.msra.mxu0 %v273
  %291 = vmatprep.subr.mxu0 0.0
  %292 = vmatpush1.msra.mxu0 %v274
  %293 = vmatprep.subr.mxu0 0.0
  %294 = vmatpush1.msra.mxu0 %v275
  %295 = vmatprep.subr.mxu0 0.0
  %296 = vmatpush1.msra.mxu0 %v276
  %297 = vmatprep.subr.mxu0 0.0
  %298 = vmatpush1.msra.mxu0 %v277
  %299 = vmatprep.subr.mxu0 0.0
  %300 = vmatpush1.msra.mxu0 %v278
  %301 = vmatprep.subr.mxu0 0.0
  %302 = vmatpush1.msra.mxu0 0.0
  %303 = vmatprep.subr.mxu0 0.0
  %304 = vmatpush1.msra.mxu0 0.0
  %305 = vmatprep.subr.mxu0 0.0
  %306 = vmatpush1.msra.mxu0 0.0
  %307 = vmatprep.subr.mxu0 0.0
  %308 = vmatpush1.msra.mxu0 0.0
  %309 = vmatprep.subr.mxu0 0.0
  %310 = vmatpush1.msra.mxu0 0.0
  %311 = vmatprep.subr.mxu0 0.0
  %312 = vmatpush1.msra.mxu0 0.0
  %313 = vmatprep.subr.mxu0 0.0
  %314 = vmatpush1.msra.mxu0 0.0
  %315 = vmatprep.subr.mxu0 0.0
  %316 = vmatpush1.msra.mxu0 0.0
  %317 = vmatprep.subr.mxu0 0.0
  %318 = vmatpush1.msra.mxu0 0.0
  %319 = vmatprep.subr.mxu0 0.0
  %320 = vmatpush1.msra.mxu0 0.0
  %321 = vmatprep.subr.mxu0 0.0
  %322 = vmatpush1.msra.mxu0 0.0
  %323 = vmatprep.subr.mxu0 0.0
  %324 = vmatpush1.msra.mxu0 0.0
  %325 = vmatprep.subr.mxu0 0.0
  %326 = vmatpush1.msra.mxu0 0.0
  %327 = vmatprep.subr.mxu0 0.0
  %328 = vmatpush1.msra.mxu0 0.0
  %329 = vmatprep.subr.mxu0 0.0
  %330 = vmatpush1.msra.mxu0 0.0
  %331 = vmatprep.subr.mxu0 0.0
  %332 = vmatpush1.msra.mxu0 0.0
  %333 = vmatprep.subr.mxu0 0.0
  %334 = vmatpush1.msra.mxu0 0.0
  %335 = vmatprep.subr.mxu0 0.0
  %336 = vmatpush1.msra.mxu0 0.0
  %337 = vmatprep.subr.mxu0 0.0
  %338 = vmatpush1.msra.mxu0 0.0
  %339 = vmatprep.subr.mxu0 0.0
  %340 = vmatpush1.msra.mxu0 0.0
  %341 = vmatprep.subr.mxu0 0.0
  %342 = vmatpush1.msra.mxu0 0.0
  %343 = vmatprep.subr.mxu0 0.0
  %344 = vmatpush1.msra.mxu0 0.0
  %345 = vmatprep.subr.mxu0 0.0
  %346 = vmatpush1.msra.mxu0 0.0
  %347 = vmatprep.subr.mxu0 0.0
  %348 = vmatpush1.msra.mxu0 0.0
  %349 = vmatprep.subr.mxu0 0.0
  %350 = vmatpush1.msra.mxu0 0.0
  %351 = vmatprep.mubr.f32.mxu0 0.0
  %352 = vmatmul.mubr.f32.gmra.mrb[0].mxu0 %v283
  %v353 = vpop.f32.mrb[0].mxu0
  %v354 = vadd.f32 0.0, %v353
  %v355 = vpop.f32.mrb[0].mxu0
  %356 = vmatprep.mubr.f32.mxu0 0.0
  %357 = vmatmul.mubr.f32.gmra.mrb[0].mxu0 %v285
  %v358 = vpop.f32.mrb[0].mxu0
  %v359 = vadd.f32 0.0, %v358
  %v360 = vpop.f32.mrb[0].mxu0
  %361 = vdwg.mxu0
  %v362 = vsel %vm191, %v168, 0
  %v364 = vsel %vm191, %v169, 0
  %366 = vmatprep.subr.mxu0 0.0
  %367 = vmatpush1.msra.mxu0 %v170
  %368 = vmatprep.subr.mxu0 0.0
  %369 = vmatpush1.msra.mxu0 %v171
  %370 = vmatprep.subr.mxu0 0.0
  %371 = vmatpush1.msra.mxu0 %v172
  %372 = vmatprep.subr.mxu0 0.0
  %373 = vmatpush1.msra.mxu0 %v173
  %374 = vmatprep.subr.mxu0 0.0
  %375 = vmatpush1.msra.mxu0 %v174
  %376 = vmatprep.subr.mxu0 0.0
  %377 = vmatpush1.msra.mxu0 %v175
  %378 = vmatprep.subr.mxu0 0.0
  %379 = vmatpush1.msra.mxu0 %v176
  %380 = vmatprep.subr.mxu0 0.0
  %381 = vmatpush1.msra.mxu0 0.0
  %382 = vmatprep.subr.mxu0 0.0
  %383 = vmatpush1.msra.mxu0 0.0
  %384 = vmatprep.subr.mxu0 0.0
  %385 = vmatpush1.msra.mxu0 0.0
  %386 = vmatprep.subr.mxu0 0.0
  %387 = vmatpush1.msra.mxu0 0.0
  %388 = vmatprep.subr.mxu0 0.0
  %389 = vmatpush1.msra.mxu0 0.0
  %390 = vmatprep.subr.mxu0 0.0
  %391 = vmatpush1.msra.mxu0 0.0
  %392 = vmatprep.subr.mxu0 0.0
  %393 = vmatpush1.msra.mxu0 0.0
  %394 = vmatprep.subr.mxu0 0.0
  %395 = vmatpush1.msra.mxu0 0.0
  %396 = vmatprep.subr.mxu0 0.0
  %397 = vmatpush1.msra.mxu0 0.0
  %398 = vmatprep.subr.mxu0 0.0
  %399 = vmatpush1.msra.mxu0 0.0
  %400 = vmatprep.subr.mxu0 0.0
  %401 = vmatpush1.msra.mxu0 0.0
  %402 = vmatprep.subr.mxu0 0.0
  %403 = vmatpush1.msra.mxu0 0.0
  %404 = vmatprep.subr.mxu0 0.0
  %405 = vmatpush1.msra.mxu0 0.0
  %406 = vmatprep.subr.mxu0 0.0
  %407 = vmatpush1.msra.mxu0 0.0
  %408 = vmatprep.subr.mxu0 0.0
  %409 = vmatpush1.msra.mxu0 0.0
  %410 = vmatprep.subr.mxu0 0.0
  %411 = vmatpush1.msra.mxu0 0.0
  %412 = vmatprep.subr.mxu0 0.0
  %413 = vmatpush1.msra.mxu0 0.0
  %414 = vmatprep.subr.mxu0 0.0
  %415 = vmatpush1.msra.mxu0 0.0
  %416 = vmatprep.subr.mxu0 0.0
  %417 = vmatpush1.msra.mxu0 0.0
  %418 = vmatprep.subr.mxu0 0.0
  %419 = vmatpush1.msra.mxu0 0.0
  %420 = vmatprep.subr.mxu0 0.0
  %421 = vmatpush1.msra.mxu0 0.0
  %422 = vmatprep.subr.mxu0 0.0
  %423 = vmatpush1.msra.mxu0 0.0
  %424 = vmatprep.subr.mxu0 0.0
  %425 = vmatpush1.msra.mxu0 0.0
  %426 = vmatprep.subr.mxu0 0.0
  %427 = vmatpush1.msra.mxu0 0.0
  %428 = vmatprep.subr.mxu0 0.0
  %429 = vmatpush1.msra.mxu0 0.0
  %430 = vmatprep.mubr.f32.mxu0 0.0
  %431 = vmatmul.mubr.f32.gmra.mrb[0].mxu0 %v362
  %v432 = vpop.f32.mrb[0].mxu0
  %v433 = vadd.f32 %v263, %v432
  %v434 = vpop.f32.mrb[0].mxu0
  %435 = vmatprep.mubr.f32.mxu0 0.0
  %436 = vmatmul.mubr.f32.gmra.mrb[0].mxu0 %v364
  %v437 = vpop.f32.mrb[0].mxu0
  %v438 = vadd.f32 %v268, %v437
  %v439 = vpop.f32.mrb[0].mxu0
  %440 = vdwg.mxu0
  %v441 = vadd.f32 %v433, %v354
  %v442 = vadd.f32 %v438, %v359
  %v443 = vld [vmem:[%s3 + $0x1] sm:$0x1]
  %v444 = vlaneseq
  %v445 = vshrl.u32 %v444, 7
  %v446 = vsub.s32 0, %v445
  %v447 = vrot.slane %v443, %v446
  %v448 = vadd.f32 %v441, %v447
  %v449 = vadd.f32 %v442, %v447
  %v450 = vmax.f32 %v448, 0.0
  %v451 = vmax.f32 %v449, 0.0
  %v452 = vld [vmem:[%s5] sm:$0xff]
  %v453 = vld [vmem:[%s5 + $0x8] sm:$0xff]
  %v454 = vld [vmem:[%s5 + $0x10] sm:$0xff]
  %v455 = vld [vmem:[%s5 + $0x18] sm:$0xff]
  %v456 = vld [vmem:[%s5 + $0x20] sm:$0xff]
  %v457 = vld [vmem:[%s5 + $0x28] sm:$0xff]
  %v458 = vld [vmem:[%s5 + $0x30] sm:$0xff]
  %v459 = vld [vmem:[%s5 + $0x38] sm:$0xff]
  %v460 = vld [vmem:[%s5 + $0x40] sm:$0xff]
  %v461 = vld [vmem:[%s5 + $0x48] sm:$0xff]
  %vm462 = vcmask 326656
  %v464 = vsel %vm462, %v450, 0
  %v467 = vsel %vm462, %v451, 0
  %469 = vmatprep.subr.mxu0 %v453
  %470 = vmatpush1.msra.mxu0 %v452
  %471 = vmatprep.subr.mxu0 %v455
  %472 = vmatpush1.msra.mxu0 %v454
  %473 = vmatprep.subr.mxu0 %v457
  %474 = vmatpush1.msra.mxu0 %v456
  %475 = vmatprep.subr.mxu0 %v459
  %476 = vmatpush1.msra.mxu0 %v458
  %477 = vmatprep.subr.mxu0 %v461
  %478 = vmatpush1.msra.mxu0 %v460
  %479 = vmatprep.subr.mxu0 0.0
  %480 = vmatpush1.msra.mxu0 0.0
  %481 = vmatprep.subr.mxu0 0.0
  %482 = vmatpush1.msra.mxu0 0.0
  %483 = vmatprep.subr.mxu0 0.0
  %484 = vmatpush1.msra.mxu0 0.0
  %485 = vmatprep.subr.mxu0 0.0
  %486 = vmatpush1.msra.mxu0 0.0
  %487 = vmatprep.subr.mxu0 0.0
  %488 = vmatpush1.msra.mxu0 0.0
  %489 = vmatprep.subr.mxu0 0.0
  %490 = vmatpush1.msra.mxu0 0.0
  %491 = vmatprep.subr.mxu0 0.0
  %492 = vmatpush1.msra.mxu0 0.0
  %493 = vmatprep.subr.mxu0 0.0
  %494 = vmatpush1.msra.mxu0 0.0
  %495 = vmatprep.subr.mxu0 0.0
  %496 = vmatpush1.msra.mxu0 0.0
  %497 = vmatprep.subr.mxu0 0.0
  %498 = vmatpush1.msra.mxu0 0.0
  %499 = vmatprep.subr.mxu0 0.0
  %500 = vmatpush1.msra.mxu0 0.0
  %501 = vmatprep.subr.mxu0 0.0
  %502 = vmatpush1.msra.mxu0 0.0
  %503 = vmatprep.subr.mxu0 0.0
  %504 = vmatpush1.msra.mxu0 0.0
  %505 = vmatprep.subr.mxu0 0.0
  %506 = vmatpush1.msra.mxu0 0.0
  %507 = vmatprep.subr.mxu0 0.0
  %508 = vmatpush1.msra.mxu0 0.0
  %509 = vmatprep.subr.mxu0 0.0
  %510 = vmatpush1.msra.mxu0 0.0
  %511 = vmatprep.subr.mxu0 0.0
  %512 = vmatpush1.msra.mxu0 0.0
  %513 = vmatprep.subr.mxu0 0.0
  %514 = vmatpush1.msra.mxu0 0.0
  %515 = vmatprep.subr.mxu0 0.0
  %516 = vmatpush1.msra.mxu0 0.0
  %517 = vmatprep.subr.mxu0 0.0
  %518 = vmatpush1.msra.mxu0 0.0
  %519 = vmatprep.subr.mxu0 0.0
  %520 = vmatpush1.msra.mxu0 0.0
  %521 = vmatprep.subr.mxu0 0.0
  %522 = vmatpush1.msra.mxu0 0.0
  %523 = vmatprep.subr.mxu0 0.0
  %524 = vmatpush1.msra.mxu0 0.0
  %525 = vmatprep.subr.mxu0 0.0
  %526 = vmatpush1.msra.mxu0 0.0
  %527 = vmatprep.subr.mxu0 0.0
  %528 = vmatpush1.msra.mxu0 0.0
  %529 = vmatprep.subr.mxu0 0.0
  %530 = vmatpush1.msra.mxu0 0.0
  %531 = vmatprep.subr.mxu0 0.0
  %532 = vmatpush1.msra.mxu0 0.0
  %533 = vmatprep.mubr.f32.mxu0 0.0
  %534 = vmatmul.mubr.f32.gmra.mrb[0].mxu0 %v464
  %v535 = vpop.f32.mrb[0].mxu0
  %v536 = vadd.f32 0.0, %v535
  %v537 = vpop.f32.mrb[0].mxu0
  %v538 = vadd.f32 0.0, %v537
  %539 = vmatprep.mubr.f32.mxu0 0.0
  %540 = vmatmul.mubr.f32.gmra.mrb[0].mxu0 %v467
  %v541 = vpop.f32.mrb[0].mxu0
  %v542 = vadd.f32 0.0, %v541
  %v543 = vpop.f32.mrb[0].mxu0
  %v544 = vadd.f32 0.0, %v543
  %545 = vdwg.mxu0
  %v546 = vlaneseq
  %v547 = vshrl.u32 %v546, 7
  %v549 = vrot.slane %v536, 1
  %550 = vrot.lane.b32.xlu0 %v549, 96
  %v551 = vpop.permute.xlu0 %550
  %v553 = vadd.f32 %v536, %v551
  %v555 = vrot.slane %v553, 2
  %556 = vrot.lane.b32.xlu0 %v555, 64
  %v557 = vpop.permute.xlu0 %556
  %v559 = vadd.f32 %v553, %v557
  %v561 = vrot.slane %v538, 4
  %v563 = vadd.f32 %v559, %v561
  %v565 = vrot.slane %v542, 1
  %566 = vrot.lane.b32.xlu0 %v565, 96
  %v567 = vpop.permute.xlu0 %566
  %v569 = vadd.f32 %v536, %v567
  %v570 = vadd.f32 %v542, %v567
  %v572 = vrot.slane %v570, 2
  %573 = vrot.lane.b32.xlu0 %v572, 64
  %v574 = vpop.permute.xlu0 %573
  %v576 = vadd.f32 %v569, %v574
  %v578 = vrot.slane %v544, 4
  %v580 = vadd.f32 %v576, %v578
  %vm581 = vcmp.ge.s32.totalorder %v547, 1
  %v582 = vsel %vm581, 1, 0
  %vm583 = vcmp.eq.s32.totalorder %v582, 1
  %v584 = vlaneseq
  %v585 = vshrl.u32 %v584, 7
  %v586 = vsub.s32 7, %v585
  %v587 = vrot.slane %v580, %v586
  %v588 = vlaneseq
  %v589 = vshrl.u32 %v588, 7
  %v590 = vsub.s32 0, %v589
  %v591 = vrot.slane %v563, %v590
  %v592 = vsel %vm583, %v587, %v591
  %v593 = vld [vmem:[%s6] sm:$0x1]
  %v594 = vlaneseq
  %v595 = vshrl.u32 %v594, 7
  %v596 = vsub.s32 0, %v595
  %v597 = vrot.slane %v593, %v596
  %v598 = vadd.f32 %v592, %v597
  %vm599 = vcmask 254976
  %v600 = vsel %vm599, %v598, 0.0
  %601 = vadd.xlane.f32.xlu0 %v600
  %v602 = vpop.xlane.xlu0 %601
  %v603 = vrcp.pop 32.0
  %v604 = vmul.f32 %v602, %v603
  %v605 = vsub.f32 %v598, %v604
  %v606 = vmul.f32 %v605, %v605
  %v607 = vsel %vm599, %v606, 0.0
  %608 = vadd.xlane.f32.xlu0 %v607
  %v609 = vpop.xlane.xlu0 %608
  %v610 = vmul.f32 %v609, %v603
  %v611 = vadd.f32 %v610, 1e-05
  %v612 = vrsqrt.pop %v611
  %v613 = vmul.f32 %v605, %v612
  %v614 = vld [vmem:[%s6 + $0x1] sm:$0x1]
  %v615 = vlaneseq
  %v616 = vshrl.u32 %v615, 7
  %v617 = vsub.s32 0, %v616
  %v618 = vrot.slane %v614, %v617
  %v619 = vmul.f32 %v613, %v618
  %v620 = vld [vmem:[%s6 + $0x2] sm:$0x1]
  %v621 = vlaneseq
  %v622 = vshrl.u32 %v621, 7
  %v623 = vsub.s32 0, %v622
  %v624 = vrot.slane %v620, %v623
  %v625 = vadd.f32 %v619, %v624
  %v626 = vtanh.pop %v625
  %v627 = vld [vmem:[%s7] sm:$0xff]
  %v628 = vld [vmem:[%s7 + $0x8] sm:$0xff]
  %v629 = vld [vmem:[%s7 + $0x10] sm:$0xff]
  %v630 = vld [vmem:[%s7 + $0x18] sm:$0xff]
  %v631 = vld [vmem:[%s1] sm:$0x3]
  %v632 = vld [vmem:[%s8] sm:$0x3f]
  %vm633 = vcmask 48128
  %v635 = vsel %vm633, %v631, 0
  %v638 = vsel %vm279, %v632, 0
  %640 = vmatprep.subr.mxu0 0.0
  %641 = vmatpush1.msra.mxu0 %v638
  %642 = vmatprep.subr.mxu0 0.0
  %643 = vmatpush1.msra.mxu0 0.0
  %644 = vmatprep.subr.mxu0 0.0
  %645 = vmatpush1.msra.mxu0 0.0
  %646 = vmatprep.subr.mxu0 0.0
  %647 = vmatpush1.msra.mxu0 0.0
  %648 = vmatprep.subr.mxu0 0.0
  %649 = vmatpush1.msra.mxu0 0.0
  %650 = vmatprep.subr.mxu0 0.0
  %651 = vmatpush1.msra.mxu0 0.0
  %652 = vmatprep.subr.mxu0 0.0
  %653 = vmatpush1.msra.mxu0 0.0
  %654 = vmatprep.subr.mxu0 0.0
  %655 = vmatpush1.msra.mxu0 0.0
  %656 = vmatprep.subr.mxu0 0.0
  %657 = vmatpush1.msra.mxu0 0.0
  %658 = vmatprep.subr.mxu0 0.0
  %659 = vmatpush1.msra.mxu0 0.0
  %660 = vmatprep.subr.mxu0 0.0
  %661 = vmatpush1.msra.mxu0 0.0
  %662 = vmatprep.subr.mxu0 0.0
  %663 = vmatpush1.msra.mxu0 0.0
  %664 = vmatprep.subr.mxu0 0.0
  %665 = vmatpush1.msra.mxu0 0.0
  %666 = vmatprep.subr.mxu0 0.0
  %667 = vmatpush1.msra.mxu0 0.0
  %668 = vmatprep.subr.mxu0 0.0
  %669 = vmatpush1.msra.mxu0 0.0
  %670 = vmatprep.subr.mxu0 0.0
  %671 = vmatpush1.msra.mxu0 0.0
  %672 = vmatprep.subr.mxu0 0.0
  %673 = vmatpush1.msra.mxu0 0.0
  %674 = vmatprep.subr.mxu0 0.0
  %675 = vmatpush1.msra.mxu0 0.0
  %676 = vmatprep.subr.mxu0 0.0
  %677 = vmatpush1.msra.mxu0 0.0
  %678 = vmatprep.subr.mxu0 0.0
  %679 = vmatpush1.msra.mxu0 0.0
  %680 = vmatprep.subr.mxu0 0.0
  %681 = vmatpush1.msra.mxu0 0.0
  %682 = vmatprep.subr.mxu0 0.0
  %683 = vmatpush1.msra.mxu0 0.0
  %684 = vmatprep.subr.mxu0 0.0
  %685 = vmatpush1.msra.mxu0 0.0
  %686 = vmatprep.subr.mxu0 0.0
  %687 = vmatpush1.msra.mxu0 0.0
  %688 = vmatprep.subr.mxu0 0.0
  %689 = vmatpush1.msra.mxu0 0.0
  %690 = vmatprep.subr.mxu0 0.0
  %691 = vmatpush1.msra.mxu0 0.0
  %692 = vmatprep.subr.mxu0 0.0
  %693 = vmatpush1.msra.mxu0 0.0
  %694 = vmatprep.subr.mxu0 0.0
  %695 = vmatpush1.msra.mxu0 0.0
  %696 = vmatprep.subr.mxu0 0.0
  %697 = vmatpush1.msra.mxu0 0.0
  %698 = vmatprep.subr.mxu0 0.0
  %699 = vmatpush1.msra.mxu0 0.0
  %700 = vmatprep.subr.mxu0 0.0
  %701 = vmatpush1.msra.mxu0 0.0
  %702 = vmatprep.subr.mxu0 0.0
  %703 = vmatpush1.msra.mxu0 0.0
  %704 = vmatprep.mubr.f32.mxu0 0.0
  %705 = vmatmul.mubr.f32.gmra.mrb[0].mxu0 %v635
  %v706 = vpop.f32.mrb[0].mxu0
  %v707 = vadd.f32 0.0, %v706
  %v708 = vpop.f32.mrb[0].mxu0
  %709 = vdwg.mxu0
  %vm710 = vcmask 261120
  %v712 = vsel %vm710, %v626, 0
  %714 = vmatprep.subr.mxu0 0.0
  %715 = vmatpush1.msra.mxu0 %v627
  %716 = vmatprep.subr.mxu0 0.0
  %717 = vmatpush1.msra.mxu0 %v628
  %718 = vmatprep.subr.mxu0 0.0
  %719 = vmatpush1.msra.mxu0 %v629
  %720 = vmatprep.subr.mxu0 0.0
  %721 = vmatpush1.msra.mxu0 %v630
  %722 = vmatprep.subr.mxu0 0.0
  %723 = vmatpush1.msra.mxu0 0.0
  %724 = vmatprep.subr.mxu0 0.0
  %725 = vmatpush1.msra.mxu0 0.0
  %726 = vmatprep.subr.mxu0 0.0
  %727 = vmatpush1.msra.mxu0 0.0
  %728 = vmatprep.subr.mxu0 0.0
  %729 = vmatpush1.msra.mxu0 0.0
  %730 = vmatprep.subr.mxu0 0.0
  %731 = vmatpush1.msra.mxu0 0.0
  %732 = vmatprep.subr.mxu0 0.0
  %733 = vmatpush1.msra.mxu0 0.0
  %734 = vmatprep.subr.mxu0 0.0
  %735 = vmatpush1.msra.mxu0 0.0
  %736 = vmatprep.subr.mxu0 0.0
  %737 = vmatpush1.msra.mxu0 0.0
  %738 = vmatprep.subr.mxu0 0.0
  %739 = vmatpush1.msra.mxu0 0.0
  %740 = vmatprep.subr.mxu0 0.0
  %741 = vmatpush1.msra.mxu0 0.0
  %742 = vmatprep.subr.mxu0 0.0
  %743 = vmatpush1.msra.mxu0 0.0
  %744 = vmatprep.subr.mxu0 0.0
  %745 = vmatpush1.msra.mxu0 0.0
  %746 = vmatprep.subr.mxu0 0.0
  %747 = vmatpush1.msra.mxu0 0.0
  %748 = vmatprep.subr.mxu0 0.0
  %749 = vmatpush1.msra.mxu0 0.0
  %750 = vmatprep.subr.mxu0 0.0
  %751 = vmatpush1.msra.mxu0 0.0
  %752 = vmatprep.subr.mxu0 0.0
  %753 = vmatpush1.msra.mxu0 0.0
  %754 = vmatprep.subr.mxu0 0.0
  %755 = vmatpush1.msra.mxu0 0.0
  %756 = vmatprep.subr.mxu0 0.0
  %757 = vmatpush1.msra.mxu0 0.0
  %758 = vmatprep.subr.mxu0 0.0
  %759 = vmatpush1.msra.mxu0 0.0
  %760 = vmatprep.subr.mxu0 0.0
  %761 = vmatpush1.msra.mxu0 0.0
  %762 = vmatprep.subr.mxu0 0.0
  %763 = vmatpush1.msra.mxu0 0.0
  %764 = vmatprep.subr.mxu0 0.0
  %765 = vmatpush1.msra.mxu0 0.0
  %766 = vmatprep.subr.mxu0 0.0
  %767 = vmatpush1.msra.mxu0 0.0
  %768 = vmatprep.subr.mxu0 0.0
  %769 = vmatpush1.msra.mxu0 0.0
  %770 = vmatprep.subr.mxu0 0.0
  %771 = vmatpush1.msra.mxu0 0.0
  %772 = vmatprep.subr.mxu0 0.0
  %773 = vmatpush1.msra.mxu0 0.0
  %774 = vmatprep.subr.mxu0 0.0
  %775 = vmatpush1.msra.mxu0 0.0
  %776 = vmatprep.subr.mxu0 0.0
  %777 = vmatpush1.msra.mxu0 0.0
  %778 = vmatprep.mubr.f32.mxu0 0.0
  %779 = vmatmul.mubr.f32.gmra.mrb[0].mxu0 %v712
  %v780 = vpop.f32.mrb[0].mxu0
  %v781 = vadd.f32 %v707, %v780
  %v782 = vpop.f32.mrb[0].mxu0
  %783 = vdwg.mxu0
  %v784 = vld [vmem:[%s11] sm:$0x1]
  %v785 = vlaneseq
  %v786 = vshrl.u32 %v785, 7
  %v787 = vsub.s32 0, %v786
  %v788 = vrot.slane %v784, %v787
  %v789 = vadd.f32 %v781, %v788
  %v790 = vmax.f32 %v789, 0.0
  %v791 = vld [vmem:[%s9] sm:$0xff]
  %v792 = vld [vmem:[%s9 + $0x8] sm:$0xff]
  %v793 = vld [vmem:[%s9 + $0x10] sm:$0xff]
  %v794 = vld [vmem:[%s9 + $0x18] sm:$0xff]
  %v795 = vld [vmem:[%s9 + $0x20] sm:$0xff]
  %v796 = vld [vmem:[%s9 + $0x28] sm:$0xff]
  %v797 = vld [vmem:[%s9 + $0x30] sm:$0xff]
  %v798 = vld [vmem:[%s9 + $0x38] sm:$0xff]
  %v799 = vld [vmem:[%s11 + $0x1] sm:$0x1]
  %v800 = vlaneseq
  %v801 = vshrl.u32 %v800, 7
  %v802 = vsub.s32 0, %v801
  %v803 = vrot.slane %v799, %v802
  %vm804 = vcmask 523264
  %v806 = vsel %vm804, %v790, 0
  %808 = vmatprep.subr.mxu0 0.0
  %809 = vmatpush1.msra.mxu0 %v791
  %810 = vmatprep.subr.mxu0 0.0
  %811 = vmatpush1.msra.mxu0 %v792
  %812 = vmatprep.subr.mxu0 0.0
  %813 = vmatpush1.msra.mxu0 %v793
  %814 = vmatprep.subr.mxu0 0.0
  %815 = vmatpush1.msra.mxu0 %v794
  %816 = vmatprep.subr.mxu0 0.0
  %817 = vmatpush1.msra.mxu0 %v795
  %818 = vmatprep.subr.mxu0 0.0
  %819 = vmatpush1.msra.mxu0 %v796
  %820 = vmatprep.subr.mxu0 0.0
  %821 = vmatpush1.msra.mxu0 %v797
  %822 = vmatprep.subr.mxu0 0.0
  %823 = vmatpush1.msra.mxu0 %v798
  %824 = vmatprep.subr.mxu0 0.0
  %825 = vmatpush1.msra.mxu0 0.0
  %826 = vmatprep.subr.mxu0 0.0
  %827 = vmatpush1.msra.mxu0 0.0
  %828 = vmatprep.subr.mxu0 0.0
  %829 = vmatpush1.msra.mxu0 0.0
  %830 = vmatprep.subr.mxu0 0.0
  %831 = vmatpush1.msra.mxu0 0.0
  %832 = vmatprep.subr.mxu0 0.0
  %833 = vmatpush1.msra.mxu0 0.0
  %834 = vmatprep.subr.mxu0 0.0
  %835 = vmatpush1.msra.mxu0 0.0
  %836 = vmatprep.subr.mxu0 0.0
  %837 = vmatpush1.msra.mxu0 0.0
  %838 = vmatprep.subr.mxu0 0.0
  %839 = vmatpush1.msra.mxu0 0.0
  %840 = vmatprep.subr.mxu0 0.0
  %841 = vmatpush1.msra.mxu0 0.0
  %842 = vmatprep.subr.mxu0 0.0
  %843 = vmatpush1.msra.mxu0 0.0
  %844 = vmatprep.subr.mxu0 0.0
  %845 = vmatpush1.msra.mxu0 0.0
  %846 = vmatprep.subr.mxu0 0.0
  %847 = vmatpush1.msra.mxu0 0.0
  %848 = vmatprep.subr.mxu0 0.0
  %849 = vmatpush1.msra.mxu0 0.0
  %850 = vmatprep.subr.mxu0 0.0
  %851 = vmatpush1.msra.mxu0 0.0
  %852 = vmatprep.subr.mxu0 0.0
  %853 = vmatpush1.msra.mxu0 0.0
  %854 = vmatprep.subr.mxu0 0.0
  %855 = vmatpush1.msra.mxu0 0.0
  %856 = vmatprep.subr.mxu0 0.0
  %857 = vmatpush1.msra.mxu0 0.0
  %858 = vmatprep.subr.mxu0 0.0
  %859 = vmatpush1.msra.mxu0 0.0
  %860 = vmatprep.subr.mxu0 0.0
  %861 = vmatpush1.msra.mxu0 0.0
  %862 = vmatprep.subr.mxu0 0.0
  %863 = vmatpush1.msra.mxu0 0.0
  %864 = vmatprep.subr.mxu0 0.0
  %865 = vmatpush1.msra.mxu0 0.0
  %866 = vmatprep.subr.mxu0 0.0
  %867 = vmatpush1.msra.mxu0 0.0
  %868 = vmatprep.subr.mxu0 0.0
  %869 = vmatpush1.msra.mxu0 0.0
  %870 = vmatprep.subr.mxu0 0.0
  %871 = vmatpush1.msra.mxu0 0.0
  %872 = vmatprep.mubr.f32.mxu0 0.0
  %873 = vmatmul.mubr.f32.gmra.mrb[0].mxu0 %v806
  %v874 = vpop.f32.mrb[0].mxu0
  %v875 = vadd.f32 %v803, %v874
  %v876 = vpop.f32.mrb[0].mxu0
  %877 = vdwg.mxu0
  %v878 = vmax.f32 %v875, 0.0
  %v879 = vld [vmem:[%s10] sm:$0xff]
  %v880 = vld [vmem:[%s10 + $0x8] sm:$0xff]
  %v881 = vld [vmem:[%s10 + $0x10] sm:$0xff]
  %v882 = vld [vmem:[%s10 + $0x18] sm:$0xff]
  %v883 = vld [vmem:[%s10 + $0x20] sm:$0xff]
  %v884 = vld [vmem:[%s10 + $0x28] sm:$0xff]
  %v885 = vld [vmem:[%s10 + $0x30] sm:$0xff]
  %v886 = vld [vmem:[%s10 + $0x38] sm:$0xff]
  %v887 = vld [vmem:[%s11 + $0x2] sm:$0x1]
  %v888 = vlaneseq
  %v889 = vshrl.u32 %v888, 7
  %v890 = vsub.s32 0, %v889
  %v891 = vrot.slane %v887, %v890
  %v893 = vsel %vm804, %v878, 0
  %895 = vmatprep.subr.mxu0 0.0
  %896 = vmatpush1.msra.mxu0 %v879
  %897 = vmatprep.subr.mxu0 0.0
  %898 = vmatpush1.msra.mxu0 %v880
  %899 = vmatprep.subr.mxu0 0.0
  %900 = vmatpush1.msra.mxu0 %v881
  %901 = vmatprep.subr.mxu0 0.0
  %902 = vmatpush1.msra.mxu0 %v882
  %903 = vmatprep.subr.mxu0 0.0
  %904 = vmatpush1.msra.mxu0 %v883
  %905 = vmatprep.subr.mxu0 0.0
  %906 = vmatpush1.msra.mxu0 %v884
  %907 = vmatprep.subr.mxu0 0.0
  %908 = vmatpush1.msra.mxu0 %v885
  %909 = vmatprep.subr.mxu0 0.0
  %910 = vmatpush1.msra.mxu0 %v886
  %911 = vmatprep.subr.mxu0 0.0
  %912 = vmatpush1.msra.mxu0 0.0
  %913 = vmatprep.subr.mxu0 0.0
  %914 = vmatpush1.msra.mxu0 0.0
  %915 = vmatprep.subr.mxu0 0.0
  %916 = vmatpush1.msra.mxu0 0.0
  %917 = vmatprep.subr.mxu0 0.0
  %918 = vmatpush1.msra.mxu0 0.0
  %919 = vmatprep.subr.mxu0 0.0
  %920 = vmatpush1.msra.mxu0 0.0
  %921 = vmatprep.subr.mxu0 0.0
  %922 = vmatpush1.msra.mxu0 0.0
  %923 = vmatprep.subr.mxu0 0.0
  %924 = vmatpush1.msra.mxu0 0.0
  %925 = vmatprep.subr.mxu0 0.0
  %926 = vmatpush1.msra.mxu0 0.0
  %927 = vmatprep.subr.mxu0 0.0
  %928 = vmatpush1.msra.mxu0 0.0
  %929 = vmatprep.subr.mxu0 0.0
  %930 = vmatpush1.msra.mxu0 0.0
  %931 = vmatprep.subr.mxu0 0.0
  %932 = vmatpush1.msra.mxu0 0.0
  %933 = vmatprep.subr.mxu0 0.0
  %934 = vmatpush1.msra.mxu0 0.0
  %935 = vmatprep.subr.mxu0 0.0
  %936 = vmatpush1.msra.mxu0 0.0
  %937 = vmatprep.subr.mxu0 0.0
  %938 = vmatpush1.msra.mxu0 0.0
  %939 = vmatprep.subr.mxu0 0.0
  %940 = vmatpush1.msra.mxu0 0.0
  %941 = vmatprep.subr.mxu0 0.0
  %942 = vmatpush1.msra.mxu0 0.0
  %943 = vmatprep.subr.mxu0 0.0
  %944 = vmatpush1.msra.mxu0 0.0
  %945 = vmatprep.subr.mxu0 0.0
  %946 = vmatpush1.msra.mxu0 0.0
  %947 = vmatprep.subr.mxu0 0.0
  %948 = vmatpush1.msra.mxu0 0.0
  %949 = vmatprep.subr.mxu0 0.0
  %950 = vmatpush1.msra.mxu0 0.0
  %951 = vmatprep.subr.mxu0 0.0
  %952 = vmatpush1.msra.mxu0 0.0
  %953 = vmatprep.subr.mxu0 0.0
  %954 = vmatpush1.msra.mxu0 0.0
  %955 = vmatprep.subr.mxu0 0.0
  %956 = vmatpush1.msra.mxu0 0.0
  %957 = vmatprep.subr.mxu0 0.0
  %958 = vmatpush1.msra.mxu0 0.0
  %959 = vmatprep.mubr.f32.mxu0 0.0
  %960 = vmatmul.mubr.f32.gmra.mrb[0].mxu0 %v893
  %v961 = vpop.f32.mrb[0].mxu0
  %v962 = vadd.f32 %v891, %v961
  %v963 = vpop.f32.mrb[0].mxu0
  %964 = vdwg.mxu0
  %vm965 = vcmask 9216
  %966 = vst.msk [vmem:[%s12] sm:$0x3] %vm965, %v962
  // Predicated region
  $region50: #{critic_forward.1} parent=0 // pred_check
    _
  $region51: #{critic_forward.1} parent=0 // pred_check_branch
    %968 = sbr.rel (0) target = $region53
  $region52: #{critic_forward.1} parent=0 // pred_region
    _
  $region53: #{critic_forward.1} parent=0 // pred_fallthru
    _
  // Predicated region
  $region54: #{critic_forward.1} parent=0 // pred_check
    _
  $region55: #{critic_forward.1} parent=0 // pred_check_branch
    %970 = sbr.rel (0) target = $region57
  $region56: #{critic_forward.1} parent=0 // pred_region
    _
  $region57: #{critic_forward.1} parent=0 // pred_fallthru
    _

</llo_original>
